<compile_context>
chip_gen: v6e
topology: v6e:2x2x1
jax: 0.10.0
libtpu: 0.0.40
codegen_flags: <defaults>
</compile_context>

<pallas_src>
import functools

import jax
import jax.numpy as jnp
from jax.experimental import pallas as pl
from jax.experimental.pallas import tpu as pltpu


def _se_kernel(x_ref, w1_ref, w2_ref, o_ref, *, bb, inv_s):
    """SE forward for one (bb, C, S_pad) block.

    x_ref / o_ref : (bb, C, S_pad) — channels on sublanes, spatial on lanes.
    w1_ref        : (Cr, C)  first Linear weight (PyTorch layout, no bias).
    w2_ref        : (C, Cr)  second Linear weight (PyTorch layout, no bias).
    """
    # ---- Squeeze: per-row global average pool with f32 accumulation. Rows are
    # reduced one at a time so only a (C, S_pad) slice (plus its small f32 temp for
    # non-f32 inputs) is live at once — never a full-block f32 copy.
    cols = []
    for b in range(bb):
        xb = x_ref[b]                                                    # (C, S_pad)
        cols.append(jnp.sum(xb, axis=-1, keepdims=True, dtype=jnp.float32))
    y = cols[0] if bb == 1 else jnp.concatenate(cols, axis=-1)           # (C, bb)
    y = y * inv_s          # divide by the true spatial size (padding is zeros)

    # ---- Excitation, fused across the bb batch rows of this block:
    #   ReLU((Cr,C)@(C,bb)) -> sigmoid((C,Cr)@(Cr,bb)).  C stays on sublanes.
    h = jnp.maximum(jnp.dot(w1_ref[...], y, preferred_element_type=jnp.float32), 0.0)
    s = jax.nn.sigmoid(jnp.dot(w2_ref[...], h, preferred_element_type=jnp.float32))  # (C, bb)

    # ---- Scale: per-row (C,1) gate lane-broadcast against (C, S_pad); x stays in
    # its native dtype and stores are unmasked (S_pad % 128 == 0).
    for b in range(bb):
        xb = x_ref[b]
        o_ref[b] = (xb * s[:, b:b + 1].astype(xb.dtype)).astype(o_ref.dtype)


def _vmem_cap_bytes():
    """~80% of physical VMEM: ≈51 MiB on v7x, ≈102 MiB on v5e/v6e."""
    try:
        phys = int(pltpu.get_tpu_info().vmem_capacity_bytes)
    except Exception:
        phys = 64 << 20                      # conservative (v7x-sized) fallback
    return (phys * 4) // 5


def _choose_batch_block(B, row_bytes, target_bytes, max_rows=32):
    """Largest divisor of B (capped) whose block stays under `target_bytes` and,
    when B >= 2, leaves at least 2 grid steps so both v7x TensorCores get work."""
    best = 1
    for d in range(1, min(B, max_rows) + 1):
        if B % d:
            continue
        if B >= 2 and B // d < 2:
            continue
        if d * row_bytes <= target_bytes:
            best = max(best, d)
    return best


def se_layer(x, w1, w2):
    """SE layer forward.

    x : (B, C, H, W)  (Conv2d style)  or  (B, C, L)  (Conv1d style)
    w1: (C//r, C)  first Linear weight, PyTorch layout, no bias
    w2: (C, C//r)  second Linear weight, PyTorch layout, no bias
    """
    orig_shape = x.shape
    if x.ndim == 4:
        B, C, H, W = x.shape
        S = H * W
    elif x.ndim == 3:
        B, C, S = x.shape
    else:
        raise ValueError(f"expected 3D or 4D input, got shape {x.shape}")
    Cr = w1.shape[0]

    # Lane-dense layout: flatten spatial dims and zero-pad to a multiple of 128 so
    # every load/store is a full-lane (unmasked) access.
    S_pad = ((S + 127) // 128) * 128
    x2 = x.reshape(B, C, S)
    if S_pad != S:
        x2 = jnp.pad(x2, ((0, 0), (0, 0), (0, S_pad - S)))

    dtype_bytes = jnp.dtype(x.dtype).itemsize
    row_bytes = C * S_pad * dtype_bytes
    w_bytes = (w1.size * jnp.dtype(w1.dtype).itemsize
               + w2.size * jnp.dtype(w2.dtype).itemsize)

    # Pack several batch rows per grid step so blocks land in the ~1-2 MiB sweet
    # spot (per-step overhead ~0.35 us; tiny blocks sit far below HBM roofline).
    Bb = _choose_batch_block(B, row_bytes, target_bytes=2 << 20)
    block_bytes = Bb * row_bytes
    grid = (B // Bb,)

    # VMEM budget: double-buffered in + out blocks, the per-row f32 cast temp used
    # by the squeeze for non-f32 inputs, the (tiny) weights, plus headroom; clamped
    # to a generation-aware cap below physical VMEM.
    temp_bytes = C * S_pad * 4 if x.dtype != jnp.float32 else 0
    needed = 4 * block_bytes + temp_bytes + 2 * w_bytes + (2 << 20)
    vmem_limit = int(min(max(needed, 32 << 20), _vmem_cap_bytes()))
    # TODO(synk): for huge C*S_pad where even a single-row double-buffered block
    # exceeds v7x's 64 MiB VMEM, a two-pass spatially-tiled fallback (grid axis over
    # S marked "arbitrary" accumulating partial sums, then a scale pass) is needed.

    # Memory-bound op: one read + one write of x; FLOPs are negligible.
    cost = pl.CostEstimate(
        flops=int(2 * B * C * S + 4 * B * C * Cr),
        transcendentals=int(B * C),
        bytes_accessed=int(2 * B * C * S_pad * dtype_bytes + w_bytes),
    )

    kernel = functools.partial(_se_kernel, bb=Bb, inv_s=1.0 / float(S))

    out = pl.pallas_call(
        kernel,
        out_shape=jax.ShapeDtypeStruct((B, C, S_pad), x.dtype),
        grid_spec=pltpu.PrefetchScalarGridSpec(
            num_scalar_prefetch=0,
            grid=grid,
            in_specs=[
                pl.BlockSpec((Bb, C, S_pad), lambda g: (g, 0, 0)),
                pl.BlockSpec((Cr, C), lambda g: (0, 0)),
                pl.BlockSpec((C, Cr), lambda g: (0, 0)),
            ],
            out_specs=pl.BlockSpec((Bb, C, S_pad), lambda g: (g, 0, 0)),
        ),
        compiler_params=pltpu.CompilerParams(
            dimension_semantics=("parallel",),   # shards blocks across v7x's 2 TCs
            vmem_limit_bytes=vmem_limit,
        ),
        cost_estimate=cost,
    )(x2, w1, w2)

    if S_pad != S:
        out = out[:, :, :S]
    return out.reshape(orig_shape)


def se_layer_ref(x, w1, w2):
    """Pure-JAX reference identical to the PyTorch forward."""
    if x.ndim == 4:
        y = jnp.mean(x, axis=(2, 3))
        expand = (slice(None), slice(None), None, None)
    else:
        y = jnp.mean(x, axis=2)
        expand = (slice(None), slice(None), None)
    h = jnp.maximum(y @ w1.T, 0.0)
    s = jax.nn.sigmoid(h @ w2.T)
    return x * s[expand]


if __name__ == "__main__":
    # S = 14*14 = 196 -> padded to 256 lanes inside the kernel; B=4 -> 2 rows/block.
    B, C, H, W = 4, 32, 14, 14
    reduction = 16
    Cr = C // reduction

    key = jax.random.PRNGKey(0)
    kx, k1, k2 = jax.random.split(key, 3)

    x = jax.random.normal(kx, (B, C, H, W), dtype=jnp.float32)
    # Deterministic init mimicking nn.Linear (uniform +-1/sqrt(fan_in)), no bias.
    w1 = jax.random.uniform(k1, (Cr, C), dtype=jnp.float32,
                            minval=-1.0 / (C ** 0.5), maxval=1.0 / (C ** 0.5))
    w2 = jax.random.uniform(k2, (C, Cr), dtype=jnp.float32,
                            minval=-1.0 / (Cr ** 0.5), maxval=1.0 / (Cr ** 0.5))

    out = se_layer(x, w1, w2)
    jax.block_until_ready(out)

    ref = se_layer_ref(x, w1, w2)
    assert out.shape == x.shape
    assert jnp.allclose(out, ref, atol=1e-5, rtol=1e-5), "mismatch vs reference"

    print("KERNEL_OK")
</pallas_src>

<mosaic_0001>
module attributes {stable_mosaic.version = 11 : i64} {
  func.func @_se_kernel(%arg0: i32, %arg1: memref<2x32x256xf32, #tpu.memory_space<vmem>>, %arg2: memref<2x32xf32, #tpu.memory_space<vmem>>, %arg3: memref<32x2xf32, #tpu.memory_space<vmem>>, %arg4: memref<2x32x256xf32, #tpu.memory_space<vmem>>) attributes {dimension_semantics = [#tpu.dimension_semantics<parallel>], iteration_bounds = array<i64: 2>, scalar_prefetch = 0 : i64, scratch_operands = 0 : i64, tpu.core_type = #tpu.core_type<tc>, window_params = [{transform_indices = @transform_0, window_bounds = array<i64: 2, 32, 256>}, {pipeline_mode = #tpu.pipeline_mode<synchronous>, transform_indices = @transform_1, window_bounds = array<i64: 2, 32>}, {pipeline_mode = #tpu.pipeline_mode<synchronous>, transform_indices = @transform_2, window_bounds = array<i64: 32, 2>}, {transform_indices = @transform_3, window_bounds = array<i64: 2, 32, 256>}]} {
    %c0 = arith.constant 0 : index
    %c0_0 = arith.constant 0 : index
    %c0_1 = arith.constant 0 : index
    %0 = vector.load %arg1[%c0, %c0_0, %c0_1] : memref<2x32x256xf32, #tpu.memory_space<vmem>>, vector<1x32x256xf32>
    %1 = vector.shape_cast %0 : vector<1x32x256xf32> to vector<32x256xf32>
    %cst = arith.constant dense<0.000000e+00> : vector<32xf32>
    %2 = vector.multi_reduction <add>, %1, %cst [1] : vector<32x256xf32> to vector<32xf32>
    %3 = vector.shape_cast %2 : vector<32xf32> to vector<32x1xf32>
    %c1 = arith.constant 1 : index
    %c0_2 = arith.constant 0 : index
    %c0_3 = arith.constant 0 : index
    %4 = vector.load %arg1[%c1, %c0_2, %c0_3] : memref<2x32x256xf32, #tpu.memory_space<vmem>>, vector<1x32x256xf32>
    %5 = vector.shape_cast %4 : vector<1x32x256xf32> to vector<32x256xf32>
    %cst_4 = arith.constant dense<0.000000e+00> : vector<32xf32>
    %6 = vector.multi_reduction <add>, %5, %cst_4 [1] : vector<32x256xf32> to vector<32xf32>
    %7 = vector.shape_cast %6 : vector<32xf32> to vector<32x1xf32>
    %8 = tpu.concatenate %3, %7 in 1 : vector<32x1xf32>, vector<32x1xf32> -> vector<32x2xf32>
    %cst_5 = arith.constant 0.00510204071 : f32
    %9 = vector.broadcast %cst_5 : f32 to vector<32x2xf32>
    %10 = arith.mulf %8, %9 : vector<32x2xf32>
    %c0_6 = arith.constant 0 : index
    %c0_7 = arith.constant 0 : index
    %11 = vector.load %arg2[%c0_6, %c0_7] : memref<2x32xf32, #tpu.memory_space<vmem>>, vector<2x32xf32>
    %cst_8 = arith.constant dense<0.000000e+00> : vector<2x2xf32>
    %12 = tpu.matmul %11, %10, %cst_8 {dimension_numbers = #tpu.dot_dimension_numbers<[1], [0], [0], [1], [0, 0, 1, 1], [], []>} : vector<2x32xf32>, vector<32x2xf32>, vector<2x2xf32> -> vector<2x2xf32>
    %cst_9 = arith.constant 0.000000e+00 : f32
    %13 = vector.broadcast %cst_9 : f32 to vector<2x2xf32>
    %14 = arith.maximumf %12, %13 : vector<2x2xf32>
    %c0_10 = arith.constant 0 : index
    %c0_11 = arith.constant 0 : index
    %15 = vector.load %arg3[%c0_10, %c0_11] : memref<32x2xf32, #tpu.memory_space<vmem>>, vector<32x2xf32>
    %cst_12 = arith.constant dense<0.000000e+00> : vector<32x2xf32>
    %16 = tpu.matmul %15, %14, %cst_12 {dimension_numbers = #tpu.dot_dimension_numbers<[1], [0], [0], [1], [0, 0, 1, 1], [], []>} : vector<32x2xf32>, vector<2x2xf32>, vector<32x2xf32> -> vector<32x2xf32>
    %17 = arith.negf %16 : vector<32x2xf32>
    %18 = math.exp %17 : vector<32x2xf32>
    %cst_13 = arith.constant 1.000000e+00 : f32
    %19 = vector.broadcast %cst_13 : f32 to vector<32x2xf32>
    %20 = arith.addf %19, %18 : vector<32x2xf32>
    %21 = arith.divf %19, %20 : vector<32x2xf32>
    %c0_14 = arith.constant 0 : index
    %c0_15 = arith.constant 0 : index
    %c0_16 = arith.constant 0 : index
    %22 = vector.load %arg1[%c0_14, %c0_15, %c0_16] : memref<2x32x256xf32, #tpu.memory_space<vmem>>, vector<1x32x256xf32>
    %23 = vector.shape_cast %22 : vector<1x32x256xf32> to vector<32x256xf32>
    %24 = vector.extract_strided_slice %21 {offsets = [0, 0], sizes = [32, 1], strides = [1, 1]} : vector<32x2xf32> to vector<32x1xf32>
    %25 = vector.broadcast %24 : vector<32x1xf32> to vector<32x256xf32>
    %26 = arith.mulf %23, %25 : vector<32x256xf32>
    %c0_17 = arith.constant 0 : index
    %c0_18 = arith.constant 0 : index
    %c0_19 = arith.constant 0 : index
    %27 = vector.load %arg4[%c0_17, %c0_18, %c0_19] : memref<2x32x256xf32, #tpu.memory_space<vmem>>, vector<1x32x256xf32>
    %28 = vector.shape_cast %27 : vector<1x32x256xf32> to vector<32x256xf32>
    %29 = vector.shape_cast %26 : vector<32x256xf32> to vector<1x32x256xf32>
    tpu.vector_store %arg4[%c0_17, %c0_18, %c0_19], %29 {strides = array<i32>} : memref<2x32x256xf32, #tpu.memory_space<vmem>>, vector<1x32x256xf32>,
    %c1_20 = arith.constant 1 : index
    %c0_21 = arith.constant 0 : index
    %c0_22 = arith.constant 0 : index
    %30 = vector.load %arg1[%c1_20, %c0_21, %c0_22] : memref<2x32x256xf32, #tpu.memory_space<vmem>>, vector<1x32x256xf32>
    %31 = vector.shape_cast %30 : vector<1x32x256xf32> to vector<32x256xf32>
    %32 = vector.extract_strided_slice %21 {offsets = [0, 1], sizes = [32, 1], strides = [1, 1]} : vector<32x2xf32> to vector<32x1xf32>
    %33 = vector.broadcast %32 : vector<32x1xf32> to vector<32x256xf32>
    %34 = arith.mulf %31, %33 : vector<32x256xf32>
    %c1_23 = arith.constant 1 : index
    %c0_24 = arith.constant 0 : index
    %c0_25 = arith.constant 0 : index
    %35 = vector.load %arg4[%c1_23, %c0_24, %c0_25] : memref<2x32x256xf32, #tpu.memory_space<vmem>>, vector<1x32x256xf32>
    %36 = vector.shape_cast %35 : vector<1x32x256xf32> to vector<32x256xf32>
    %37 = vector.shape_cast %34 : vector<32x256xf32> to vector<1x32x256xf32>
    tpu.vector_store %arg4[%c1_23, %c0_24, %c0_25], %37 {strides = array<i32>} : memref<2x32x256xf32, #tpu.memory_space<vmem>>, vector<1x32x256xf32>,
    return
  }
  func.func @transform_0(%arg0: i32) -> (i32, i32, i32) {
    %c0_i32 = arith.constant 0 : i32
    %c0_i32_0 = arith.constant 0 : i32
    %c0_i32_1 = arith.constant 0 : i32
    return %arg0, %c0_i32, %c0_i32_0 : i32, i32, i32
  }
  func.func @transform_1(%arg0: i32) -> (i32, i32) {
    %c0_i32 = arith.constant 0 : i32
    %c0_i32_0 = arith.constant 0 : i32
    %c0_i32_1 = arith.constant 0 : i32
    return %c0_i32, %c0_i32_0 : i32, i32
  }
  func.func @transform_2(%arg0: i32) -> (i32, i32) {
    %c0_i32 = arith.constant 0 : i32
    %c0_i32_0 = arith.constant 0 : i32
    %c0_i32_1 = arith.constant 0 : i32
    return %c0_i32, %c0_i32_0 : i32, i32
  }
  func.func @transform_3(%arg0: i32) -> (i32, i32, i32) {
    %c0_i32 = arith.constant 0 : i32
    %c0_i32_0 = arith.constant 0 : i32
    %c0_i32_1 = arith.constant 0 : i32
    return %arg0, %c0_i32, %c0_i32_0 : i32, i32, i32
  }
}

</mosaic_0001>

<llo_original>
// kernel: tpu_custom_call.1
$region0: #{tpu_custom_call.1}
  #allocation0 [shape = 'u32[]', space=smem, size = 0x4, offset = 0x4, fixed_abs, tag = 'smem constant byte address 0x4 - core index']
  #allocation1 [shape = 'u32[144,128]{1,0:T(1,128)}', space=vmem, size = 0x12000, scoped, tag = 'internal scratch']
  %s0 = inlined_call_operand.hbm [shape: f32[4,32,256], index: 0, kind: input, shape index: {}]
  %s1 = inlined_call_operand.vmem [shape: f32[2,32], index: 1, kind: input, shape index: {}]
  %s2 = inlined_call_operand.vmem [shape: f32[32,2], index: 2, kind: input, shape index: {}]
  %s3 = inlined_call_operand.hbm [shape: f32[4,32,256], index: 3, kind: output, shape index: {}]
  %s4 = sld [smem:[#allocation0]]
  $region49: #{tpu_custom_call.1} parent=0
    _
  %s6 = ssub.s32 1, %s4
  %s7 = scalar_select 0, %s6, %s4
  $region1: #{tpu_custom_call.1} parent=0
    #allocation2 [shape = 'u8[131072]{0}', space=vmem, size = 0x20000, scoped, tag = 'input window, operand 0']
    #allocation3 [shape = 's32[2]{0}', space=sflag, size = 0x8, scoped, tag = 'scoped memory for tpu_custom_call.1']
    #allocation4 [shape = 's32[2]{0}', space=sflag, size = 0x8, scoped, tag = 'scoped memory for tpu_custom_call.1']
    #allocation5 [shape = 'u8[131072]{0}', space=vmem, size = 0x20000, scoped, tag = 'output window, operand 0']
    %8 = vsyncpa [#allocation3], 0
    %s9 = scalar_lea.sflag [#allocation3], 1
    %10 = vsyncpa %s9, 0
    %11 = vsyncpa [#allocation4], 0
    %s12 = scalar_lea.sflag [#allocation4], 1
    %13 = vsyncpa %s12, 0
    loop: start=0, step=1, limit=4
    $region2: #{tpu_custom_call.1} parent=1 // loop_pre_header
      _
    $region3: #{tpu_custom_call.1} parent=1 // loop_header
      %s15 = sphi 0, %s19
      %p16 = scmp.ge.s32.totalorder %s15, 4
      %s25 = sphi 0, %s27
      %s28 = sphi 0, %s25
      %s29 = sphi 0, %s28
      %s45 = sphi 0, %s29
      %s49 = sphi 0, %s49
      %s51 = sphi 0, %s49
      %s52 = sphi 0, %s51
      %s66 = sphi 0, %s52
      %s70 = sphi 0, %s70
      %s72 = sphi 0, %s70
      %s73 = sphi 0, %s72
      %s87 = sphi 0, %s73
      %s93 = sphi 0, %s95
      %s96 = sphi 0, %s93
      %s97 = sphi 0, %s96
      %s113 = sphi 0, %s97
    $region4: #{tpu_custom_call.1} parent=1 // loop_header_branch
      %18 = sbr.rel (%p16) target = $region8
    $region5: #{tpu_custom_call.1} parent=1 // loop_body
      %s20 = ssub.s32 %s15, 1
      %s21 = ssub.s32 %s15, 2
      %s22 = sadd.s32 %s15, 1
      %s23 = ssub.s32 %s15, %s22
      %p24 = scmp.eq.s32.totalorder %s23, 0
      %s26 = sadd.s32 %s25, 1
      %s27 = scalar_select %p24, %s25, %s26
      %p30 = pneg %p24
      %p31 = scmp.eq.s32.totalorder %s15, 1
      %p32 = por %p30, %p31
      %p33 = scmp.ne.s32.totalorder %s25, %s28
      %p34 = scmp.eq.s32.totalorder %s15, 0
      %p35 = por %p33, %p34
      %p36 = scmp.ne.s32.totalorder %s25, %s28
      %p37 = scmp.eq.s32.totalorder %s20, 1
      %p38 = por %p36, %p37
      %p39 = scmp.ne.s32.totalorder %s28, %s29
      %p40 = scmp.eq.s32.totalorder %s20, 0
      %p41 = por %p39, %p40
      %p42 = scmp.ne.s32.totalorder %s28, %s29
      %p43 = scmp.eq.s32.totalorder %s21, 1
      %p44 = por %p42, %p43
      %p46 = scmp.ne.s32.totalorder %s29, %s45
      %p47 = scmp.eq.s32.totalorder %s21, 0
      %p48 = por %p46, %p47
      %s50 = sadd.s32 %s49, 1
      %p53 = scmp.eq.s32.totalorder %s15, 1
      %p54 = scmp.ne.s32.totalorder %s49, %s51
      %p55 = scmp.eq.s32.totalorder %s15, 0
      %p56 = por %p54, %p55
      %p57 = scmp.ne.s32.totalorder %s49, %s51
      %p58 = scmp.eq.s32.totalorder %s20, 1
      %p59 = por %p57, %p58
      %p60 = scmp.ne.s32.totalorder %s51, %s52
      %p61 = scmp.eq.s32.totalorder %s20, 0
      %p62 = por %p60, %p61
      %p63 = scmp.ne.s32.totalorder %s51, %s52
      %p64 = scmp.eq.s32.totalorder %s21, 1
      %p65 = por %p63, %p64
      %p67 = scmp.ne.s32.totalorder %s52, %s66
      %p68 = scmp.eq.s32.totalorder %s21, 0
      %p69 = por %p67, %p68
      %s71 = sadd.s32 %s70, 1
      %p74 = scmp.eq.s32.totalorder %s15, 1
      %p75 = scmp.ne.s32.totalorder %s70, %s72
      %p76 = scmp.eq.s32.totalorder %s15, 0
      %p77 = por %p75, %p76
      %p78 = scmp.ne.s32.totalorder %s70, %s72
      %p79 = scmp.eq.s32.totalorder %s20, 1
      %p80 = por %p78, %p79
      %p81 = scmp.ne.s32.totalorder %s72, %s73
      %p82 = scmp.eq.s32.totalorder %s20, 0
      %p83 = por %p81, %p82
      %p84 = scmp.ne.s32.totalorder %s72, %s73
      %p85 = scmp.eq.s32.totalorder %s21, 1
      %p86 = por %p84, %p85
      %p88 = scmp.ne.s32.totalorder %s73, %s87
      %p89 = scmp.eq.s32.totalorder %s21, 0
      %p90 = por %p88, %p89
      %s91 = ssub.s32 %s15, %s22
      %p92 = scmp.eq.s32.totalorder %s91, 0
      %s94 = sadd.s32 %s93, 1
      %s95 = scalar_select %p92, %s93, %s94
      %p98 = pneg %p92
      %p99 = scmp.eq.s32.totalorder %s15, 1
      %p100 = por %p98, %p99
      %p101 = scmp.ne.s32.totalorder %s93, %s96
      %p102 = scmp.eq.s32.totalorder %s15, 0
      %p103 = por %p101, %p102
      %p104 = scmp.ne.s32.totalorder %s93, %s96
      %p105 = scmp.eq.s32.totalorder %s20, 1
      %p106 = por %p104, %p105
      %p107 = scmp.ne.s32.totalorder %s96, %s97
      %p108 = scmp.eq.s32.totalorder %s20, 0
      %p109 = por %p107, %p108
      %p110 = scmp.ne.s32.totalorder %s96, %s97
      %p111 = scmp.eq.s32.totalorder %s21, 1
      %p112 = por %p110, %p111
      %p114 = scmp.ne.s32.totalorder %s97, %s113
      %p115 = scmp.eq.s32.totalorder %s21, 0
      %p116 = por %p114, %p115
      %p117 = scmp.le.s32.totalorder 1, %s15
      %p118 = scmp.lt.s32.totalorder %s15, 3
      %p119 = pnand %p117, %p118
      %p120 = pneg %p119
      // Predicated region
      $region9: #{tpu_custom_call.1} parent=5 // pred_check
        _
      $region10: #{tpu_custom_call.1} parent=5 // pred_check_branch
        %122 = sbr.rel (%p119) target = $region12
      $region11: #{tpu_custom_call.1} parent=5 // pred_region
        %s123 = ssub.s32 %s15, 1
        // Predicated region
        $region13: #{tpu_custom_call.1} parent=11 // pred_check
          %p124 = pneg %p62
        $region14: #{tpu_custom_call.1} parent=11 // pred_check_branch
          %126 = sbr.rel (%p124) target = $region16
        $region15: #{tpu_custom_call.1} parent=11 // pred_region
          _
        $region16: #{tpu_custom_call.1} parent=11 // pred_fallthru
          _
        // Predicated region
        $region17: #{tpu_custom_call.1} parent=11 // pred_check
          %p127 = pneg %p83
        $region18: #{tpu_custom_call.1} parent=11 // pred_check_branch
          %129 = sbr.rel (%p127) target = $region20
        $region19: #{tpu_custom_call.1} parent=11 // pred_region
          _
        $region20: #{tpu_custom_call.1} parent=11 // pred_fallthru
          _
      $region12: #{tpu_custom_call.1} parent=5 // pred_fallthru
        _
      %p130 = scmp.lt.s32.totalorder %s15, 2
      // Predicated region
      $region21: #{tpu_custom_call.1} parent=5 // pred_check
        %p131 = pneg %p130
      $region22: #{tpu_custom_call.1} parent=5 // pred_check_branch
        %133 = sbr.rel (%p131) target = $region24
      $region23: #{tpu_custom_call.1} parent=5 // pred_region
        // Predicated region
        $region25: #{tpu_custom_call.1} parent=23 // pred_check
          %p134 = pneg %p35
        $region26: #{tpu_custom_call.1} parent=23 // pred_check_branch
          %136 = sbr.rel (%p134) target = $region28
        $region27: #{tpu_custom_call.1} parent=23 // pred_region
          %s137 = sand.u32 %s25, 1
          %s138 = scalar_lea.sflag [#allocation3], %s137
          %s139 = sand.u32 %s25, 1
          %s140 = smul.addr %s139, 128
          %s141 = scalar_lea.vmem [#allocation2], %s140
          %s142 = smul.u32 2, %s15
          %s144 = ssub.s32 2048, 2048
          %145 = vsyncadd %s138, %s144
          %s146 = smul.addr %s142, 8
          %s147 = smul.addr %s146, 128
          %s148 = scalar_lea.hbm %s0, %s147
          %s149 = sshll.u32 %s141, 4
          %s150 = int_to_ptr.vmem [resolvable:$true] %s149
          %155 = dma.hbm_to_vmem [thread:$0]  %s148, 2048, %s150, %s138, 256, 256, 16
        $region28: #{tpu_custom_call.1} parent=23 // pred_fallthru
          _
      $region24: #{tpu_custom_call.1} parent=5 // pred_fallthru
        _
      %p156 = scmp.le.s32.totalorder 1, %s15
      %p157 = scmp.lt.s32.totalorder %s15, 3
      %p158 = pnand %p156, %p157
      %p159 = pneg %p158
      // Predicated region
      $region29: #{tpu_custom_call.1} parent=5 // pred_check
        _
      $region30: #{tpu_custom_call.1} parent=5 // pred_check_branch
        %161 = sbr.rel (%p158) target = $region32
      $region31: #{tpu_custom_call.1} parent=5 // pred_region
        %s162 = ssub.s32 %s15, 1
        %s163 = sand.u32 %s28, 1
        %s164 = scalar_lea.sflag [#allocation3], %s163
        %s165 = sand.u32 %s28, 1
        %s166 = smul.addr %s165, 128
        %s167 = scalar_lea.vmem [#allocation2], %s166
        // Predicated region
        $region33: #{tpu_custom_call.1} parent=31 // pred_check
          %p168 = pneg %p41
        $region34: #{tpu_custom_call.1} parent=31 // pred_check_branch
          %170 = sbr.rel (%p168) target = $region36
        $region35: #{tpu_custom_call.1} parent=31 // pred_region
          %171 = dma.done %s164, 2048
        $region36: #{tpu_custom_call.1} parent=31 // pred_fallthru
          _
        %s172 = sand.u32 %s28, 1
        %s173 = scalar_lea.sflag [#allocation3], %s172
        %s174 = sand.u32 %s28, 1
        %s175 = smul.addr %s174, 128
        %s176 = scalar_lea.vmem [#allocation2], %s175
        %p177 = pneg %p41
        %p178 = pneg %p38
        %p179 = pneg %p62
        %p180 = pneg %p59
        %p181 = pneg %p83
        %p182 = pneg %p80
        %p183 = pneg %p109
        %p184 = pneg %p106
        %s185 = sand.u32 %s96, 1
        %s186 = scalar_lea.sflag [#allocation4], %s185
        %s187 = sand.u32 %s96, 1
        %s188 = smul.addr %s187, 128
        %s189 = scalar_lea.vmem [#allocation5], %s188
        %s190 = smul.u32 2, %s20
        %s191 = smul.u32 2, %s20
        %v192 = vld [vmem:[%s167] sm:$0xff]
        %v193 = vld [vmem:[%s167 + $0x8] sm:$0xff]
        %v194 = vld [vmem:[%s167 + $0x10] sm:$0xff]
        %v195 = vld [vmem:[%s167 + $0x18] sm:$0xff]
        %v196 = vld [vmem:[%s167 + $0x20] sm:$0xff]
        %v197 = vld [vmem:[%s167 + $0x28] sm:$0xff]
        %v198 = vld [vmem:[%s167 + $0x30] sm:$0xff]
        %v199 = vld [vmem:[%s167 + $0x38] sm:$0xff]
        %v200 = vadd.f32 %v192, %v193
        %201 = vadd.xlane.f32.xlu0 %v200
        %v202 = vpop.xlane.xlu0 %201
        %v203 = vadd.f32 %v194, %v195
        %204 = vadd.xlane.f32.xlu0 %v203
        %v205 = vpop.xlane.xlu0 %204
        %v206 = vadd.f32 %v196, %v197
        %207 = vadd.xlane.f32.xlu0 %v206
        %v208 = vpop.xlane.xlu0 %207
        %v209 = vadd.f32 %v198, %v199
        %210 = vadd.xlane.f32.xlu0 %v209
        %v211 = vpop.xlane.xlu0 %210
        %s212 = scalar_lea.vmem %s167, 64 [#allocation2]
        %v213 = vld [vmem:[%s212] sm:$0xff]
        %v214 = vld [vmem:[%s212 + $0x8] sm:$0xff]
        %v215 = vld [vmem:[%s212 + $0x10] sm:$0xff]
        %v216 = vld [vmem:[%s212 + $0x18] sm:$0xff]
        %v217 = vld [vmem:[%s212 + $0x20] sm:$0xff]
        %v218 = vld [vmem:[%s212 + $0x28] sm:$0xff]
        %v219 = vld [vmem:[%s212 + $0x30] sm:$0xff]
        %v220 = vld [vmem:[%s212 + $0x38] sm:$0xff]
        %v221 = vadd.f32 %v213, %v214
        %222 = vadd.xlane.f32.xlu0 %v221
        %v223 = vpop.xlane.xlu0 %222
        %v224 = vadd.f32 %v215, %v216
        %225 = vadd.xlane.f32.xlu0 %v224
        %v226 = vpop.xlane.xlu0 %225
        %v227 = vadd.f32 %v217, %v218
        %228 = vadd.xlane.f32.xlu0 %v227
        %v229 = vpop.xlane.xlu0 %228
        %v230 = vadd.f32 %v219, %v220
        %231 = vadd.xlane.f32.xlu0 %v230
        %v232 = vpop.xlane.xlu0 %231
        %vm233 = vcmask 7168
        %v234 = vsel %vm233, %v202, %v223
        %v235 = vsel %vm233, %v205, %v226
        %v236 = vsel %vm233, %v208, %v229
        %v237 = vsel %vm233, %v211, %v232
        %v238 = vmul.f32 %v234, 0.0051020407
        %v239 = vmul.f32 %v235, 0.0051020407
        %v240 = vmul.f32 %v236, 0.0051020407
        %v241 = vmul.f32 %v237, 0.0051020407
        %v242 = vld [vmem:[%s1] sm:$0x3]
        %vm243 = vcmask 261120
        %v245 = vsel %vm243, %v242, 0
        %247 = vmatprep.subr.mxu0 0.0
        %248 = vmatpush1.msra.mxu0 0.0
        %249 = vmatprep.subr.mxu0 0.0
        %250 = vmatpush1.msra.mxu0 0.0
        %251 = vmatprep.subr.mxu0 0.0
        %252 = vmatpush1.msra.mxu0 0.0
        %253 = vmatprep.subr.mxu0 0.0
        %254 = vmatpush1.msra.mxu0 0.0
        %255 = vmatprep.subr.mxu0 0.0
        %256 = vmatpush1.msra.mxu0 0.0
        %257 = vmatprep.subr.mxu0 0.0
        %258 = vmatpush1.msra.mxu0 0.0
        %259 = vmatprep.subr.mxu0 0.0
        %260 = vmatpush1.msra.mxu0 0.0
        %261 = vmatprep.subr.mxu0 0.0
        %262 = vmatpush1.msra.mxu0 0.0
        %263 = vmatprep.subr.mxu0 0.0
        %264 = vmatpush1.msra.mxu0 0.0
        %265 = vmatprep.subr.mxu0 0.0
        %266 = vmatpush1.msra.mxu0 0.0
        %267 = vmatprep.subr.mxu0 0.0
        %268 = vmatpush1.msra.mxu0 0.0
        %269 = vmatprep.subr.mxu0 0.0
        %270 = vmatpush1.msra.mxu0 0.0
        %271 = vmatprep.subr.mxu0 0.0
        %272 = vmatpush1.msra.mxu0 %v241
        %273 = vmatprep.subr.mxu0 0.0
        %274 = vmatpush1.msra.mxu0 %v240
        %275 = vmatprep.subr.mxu0 0.0
        %276 = vmatpush1.msra.mxu0 %v239
        %277 = vmatprep.subr.mxu0 0.0
        %278 = vmatpush1.msra.mxu0 %v238
        %279 = vmatprep.subr.mxu0 0.0
        %280 = vmatpush2.msra.mxu0 0.0
        %281 = vmatprep.subr.mxu0 0.0
        %282 = vmatpush2.msra.mxu0 0.0
        %283 = vmatprep.subr.mxu0 0.0
        %284 = vmatpush2.msra.mxu0 0.0
        %285 = vmatprep.subr.mxu0 0.0
        %286 = vmatpush2.msra.mxu0 0.0
        %287 = vmatprep.subr.mxu0 0.0
        %288 = vmatpush2.msra.mxu0 0.0
        %289 = vmatprep.subr.mxu0 0.0
        %290 = vmatpush2.msra.mxu0 0.0
        %291 = vmatprep.subr.mxu0 0.0
        %292 = vmatpush2.msra.mxu0 0.0
        %293 = vmatprep.subr.mxu0 0.0
        %294 = vmatpush2.msra.mxu0 0.0
        %295 = vmatprep.subr.mxu0 0.0
        %296 = vmatpush2.msra.mxu0 0.0
        %297 = vmatprep.subr.mxu0 0.0
        %298 = vmatpush2.msra.mxu0 0.0
        %299 = vmatprep.subr.mxu0 0.0
        %300 = vmatpush2.msra.mxu0 0.0
        %301 = vmatprep.subr.mxu0 0.0
        %302 = vmatpush2.msra.mxu0 0.0
        %303 = vmatprep.subr.mxu0 0.0
        %304 = vmatpush2.msra.mxu0 0.0
        %305 = vmatprep.subr.mxu0 0.0
        %306 = vmatpush2.msra.mxu0 0.0
        %307 = vmatprep.subr.mxu0 0.0
        %308 = vmatpush2.msra.mxu0 0.0
        %309 = vmatprep.subr.mxu0 0.0
        %310 = vmatpush2.msra.mxu0 0.0
        %311 = vmatprep.mubr.f32.mxu0 0.0
        %312 = vmatmul.mubr.f32.gmra.mxu0 %v245
        %v313 = vpop.f32.mrf.mxu0
        %v314 = vadd.f32 0.0, %v313
        %v315 = vpop.f32.mrf.mxu0
        %316 = vdwg.mxu0
        %v317 = vmax.f32 %v314, 0.0
        %v318 = vld [vmem:[%s2] sm:$0xff]
        %v319 = vld [vmem:[%s2 + $0x8] sm:$0xff]
        %v320 = vld [vmem:[%s2 + $0x10] sm:$0xff]
        %v321 = vld [vmem:[%s2 + $0x18] sm:$0xff]
        %vm322 = vcmask 15360
        %v324 = vsel %vm322, %v318, 0
        %v327 = vsel %vm322, %v319, 0
        %v330 = vsel %vm322, %v320, 0
        %v333 = vsel %vm322, %v321, 0
        %vm335 = vcmask 1041408
        %v337 = vsel %vm335, %v317, 0
        %339 = vmatprep.subr.mxu0 0.0
        %340 = vmatpush1.msra.mxu0 0.0
        %341 = vmatprep.subr.mxu0 0.0
        %342 = vmatpush1.msra.mxu0 0.0
        %343 = vmatprep.subr.mxu0 0.0
        %344 = vmatpush1.msra.mxu0 0.0
        %345 = vmatprep.subr.mxu0 0.0
        %346 = vmatpush1.msra.mxu0 0.0
        %347 = vmatprep.subr.mxu0 0.0
        %348 = vmatpush1.msra.mxu0 0.0
        %349 = vmatprep.subr.mxu0 0.0
        %350 = vmatpush1.msra.mxu0 0.0
        %351 = vmatprep.subr.mxu0 0.0
        %352 = vmatpush1.msra.mxu0 0.0
        %353 = vmatprep.subr.mxu0 0.0
        %354 = vmatpush1.msra.mxu0 0.0
        %355 = vmatprep.subr.mxu0 0.0
        %356 = vmatpush1.msra.mxu0 0.0
        %357 = vmatprep.subr.mxu0 0.0
        %358 = vmatpush1.msra.mxu0 0.0
        %359 = vmatprep.subr.mxu0 0.0
        %360 = vmatpush1.msra.mxu0 0.0
        %361 = vmatprep.subr.mxu0 0.0
        %362 = vmatpush1.msra.mxu0 0.0
        %363 = vmatprep.subr.mxu0 0.0
        %364 = vmatpush1.msra.mxu0 0.0
        %365 = vmatprep.subr.mxu0 0.0
        %366 = vmatpush1.msra.mxu0 0.0
        %367 = vmatprep.subr.mxu0 0.0
        %368 = vmatpush1.msra.mxu0 0.0
        %369 = vmatprep.subr.mxu0 0.0
        %370 = vmatpush1.msra.mxu0 %v337
        %371 = vmatprep.subr.mxu0 0.0
        %372 = vmatpush2.msra.mxu0 0.0
        %373 = vmatprep.subr.mxu0 0.0
        %374 = vmatpush2.msra.mxu0 0.0
        %375 = vmatprep.subr.mxu0 0.0
        %376 = vmatpush2.msra.mxu0 0.0
        %377 = vmatprep.subr.mxu0 0.0
        %378 = vmatpush2.msra.mxu0 0.0
        %379 = vmatprep.subr.mxu0 0.0
        %380 = vmatpush2.msra.mxu0 0.0
        %381 = vmatprep.subr.mxu0 0.0
        %382 = vmatpush2.msra.mxu0 0.0
        %383 = vmatprep.subr.mxu0 0.0
        %384 = vmatpush2.msra.mxu0 0.0
        %385 = vmatprep.subr.mxu0 0.0
        %386 = vmatpush2.msra.mxu0 0.0
        %387 = vmatprep.subr.mxu0 0.0
        %388 = vmatpush2.msra.mxu0 0.0
        %389 = vmatprep.subr.mxu0 0.0
        %390 = vmatpush2.msra.mxu0 0.0
        %391 = vmatprep.subr.mxu0 0.0
        %392 = vmatpush2.msra.mxu0 0.0
        %393 = vmatprep.subr.mxu0 0.0
        %394 = vmatpush2.msra.mxu0 0.0
        %395 = vmatprep.subr.mxu0 0.0
        %396 = vmatpush2.msra.mxu0 0.0
        %397 = vmatprep.subr.mxu0 0.0
        %398 = vmatpush2.msra.mxu0 0.0
        %399 = vmatprep.subr.mxu0 0.0
        %400 = vmatpush2.msra.mxu0 0.0
        %401 = vmatprep.subr.mxu0 0.0
        %402 = vmatpush2.msra.mxu0 0.0
        %403 = vmatprep.mubr.f32.mxu0 0.0
        %404 = vmatmul.mubr.f32.gmra.mxu0 %v324
        %v405 = vpop.f32.mrf.mxu0
        %v406 = vadd.f32 0.0, %v405
        %v407 = vpop.f32.mrf.mxu0
        %408 = vmatprep.mubr.f32.mxu0 0.0
        %409 = vmatmul.mubr.f32.gmra.mxu0 %v327
        %v410 = vpop.f32.mrf.mxu0
        %v411 = vadd.f32 0.0, %v410
        %v412 = vpop.f32.mrf.mxu0
        %413 = vmatprep.mubr.f32.mxu0 0.0
        %414 = vmatmul.mubr.f32.gmra.mxu0 %v330
        %v415 = vpop.f32.mrf.mxu0
        %v416 = vadd.f32 0.0, %v415
        %v417 = vpop.f32.mrf.mxu0
        %418 = vmatprep.mubr.f32.mxu0 0.0
        %419 = vmatmul.mubr.f32.gmra.mxu0 %v333
        %v420 = vpop.f32.mrf.mxu0
        %v421 = vadd.f32 0.0, %v420
        %v422 = vpop.f32.mrf.mxu0
        %423 = vdwg.mxu0
        %v424 = vxor.u32 %v406, 2147483648
        %v425 = vxor.u32 %v411, 2147483648
        %v426 = vxor.u32 %v416, 2147483648
        %v427 = vxor.u32 %v421, 2147483648
        %v428 = vmul.f32 %v424, 1.442695
        %v429 = vpow.pop %v428
        %v430 = vmul.f32 %v425, 1.442695
        %v431 = vpow.pop %v430
        %v432 = vmul.f32 %v426, 1.442695
        %v433 = vpow.pop %v432
        %v434 = vmul.f32 %v427, 1.442695
        %v435 = vpow.pop %v434
        %v436 = vadd.f32 %v429, 1.0
        %v437 = vadd.f32 %v431, 1.0
        %v438 = vadd.f32 %v433, 1.0
        %v439 = vadd.f32 %v435, 1.0
        %v440 = vrcp.pop %v436
        %v441 = vmul.f32 1.0, %v440
        %v442 = vrcp.pop %v437
        %v443 = vmul.f32 1.0, %v442
        %v444 = vrcp.pop %v438
        %v445 = vmul.f32 1.0, %v444
        %v446 = vrcp.pop %v439
        %v447 = vmul.f32 1.0, %v446
        %449 = vset.pattern.permute.xlu0 0
        %450 = vperm.xlu0 %449, %v441
        %v451 = vpop.permute.xlu0 %450
        %454 = vset.pattern.permute.xlu0 0
        %455 = vperm.xlu0 %454, %v443
        %v456 = vpop.permute.xlu0 %455
        %459 = vset.pattern.permute.xlu0 0
        %460 = vperm.xlu0 %459, %v445
        %v461 = vpop.permute.xlu0 %460
        %464 = vset.pattern.permute.xlu0 0
        %465 = vperm.xlu0 %464, %v447
        %v466 = vpop.permute.xlu0 %465
        %v468 = vmul.f32 %v192, %v451
        %v469 = vmul.f32 %v193, %v451
        %v470 = vmul.f32 %v194, %v456
        %v471 = vmul.f32 %v195, %v456
        %v472 = vmul.f32 %v196, %v461
        %v473 = vmul.f32 %v197, %v461
        %v474 = vmul.f32 %v198, %v466
        %v475 = vmul.f32 %v199, %v466
        %476 = vst [vmem:[%s189] sm:$0xff] %v468
        %477 = vst [vmem:[%s189 + $0x8] sm:$0xff] %v469
        %478 = vst [vmem:[%s189 + $0x10] sm:$0xff] %v470
        %479 = vst [vmem:[%s189 + $0x18] sm:$0xff] %v471
        %480 = vst [vmem:[%s189 + $0x20] sm:$0xff] %v472
        %481 = vst [vmem:[%s189 + $0x28] sm:$0xff] %v473
        %482 = vst [vmem:[%s189 + $0x30] sm:$0xff] %v474
        %483 = vst [vmem:[%s189 + $0x38] sm:$0xff] %v475
        %v484 = vld [vmem:[%s212] sm:$0xff]
        %v485 = vld [vmem:[%s212 + $0x8] sm:$0xff]
        %v486 = vld [vmem:[%s212 + $0x10] sm:$0xff]
        %v487 = vld [vmem:[%s212 + $0x18] sm:$0xff]
        %v488 = vld [vmem:[%s212 + $0x20] sm:$0xff]
        %v489 = vld [vmem:[%s212 + $0x28] sm:$0xff]
        %v490 = vld [vmem:[%s212 + $0x30] sm:$0xff]
        %v491 = vld [vmem:[%s212 + $0x38] sm:$0xff]
        %492 = vset.pattern.permute.xlu0 1
        %493 = vperm.xlu0 %492, %v441
        %v494 = vpop.permute.xlu0 %493
        %496 = vset.pattern.permute.xlu0 1
        %497 = vperm.xlu0 %496, %v443
        %v498 = vpop.permute.xlu0 %497
        %500 = vset.pattern.permute.xlu0 1
        %501 = vperm.xlu0 %500, %v445
        %v502 = vpop.permute.xlu0 %501
        %504 = vset.pattern.permute.xlu0 1
        %505 = vperm.xlu0 %504, %v447
        %v506 = vpop.permute.xlu0 %505
        %v508 = vmul.f32 %v484, %v494
        %v509 = vmul.f32 %v485, %v494
        %v510 = vmul.f32 %v486, %v498
        %v511 = vmul.f32 %v487, %v498
        %v512 = vmul.f32 %v488, %v502
        %v513 = vmul.f32 %v489, %v502
        %v514 = vmul.f32 %v490, %v506
        %v515 = vmul.f32 %v491, %v506
        %s516 = scalar_lea.vmem %s189, 64 [#allocation5]
        %517 = vst [vmem:[%s516] sm:$0xff] %v508
        %518 = vst [vmem:[%s516 + $0x8] sm:$0xff] %v509
        %519 = vst [vmem:[%s516 + $0x10] sm:$0xff] %v510
        %520 = vst [vmem:[%s516 + $0x18] sm:$0xff] %v511
        %521 = vst [vmem:[%s516 + $0x20] sm:$0xff] %v512
        %522 = vst [vmem:[%s516 + $0x28] sm:$0xff] %v513
        %523 = vst [vmem:[%s516 + $0x30] sm:$0xff] %v514
        %524 = vst [vmem:[%s516 + $0x38] sm:$0xff] %v515
        %s525 = sand.u32 %s96, 1
        %s526 = scalar_lea.sflag [#allocation4], %s525
        %s527 = sand.u32 %s96, 1
        %s528 = smul.addr %s527, 128
        %s529 = scalar_lea.vmem [#allocation5], %s528
        // Predicated region
        $region37: #{tpu_custom_call.1} parent=31 // pred_check
          %p530 = pneg %p106
        $region38: #{tpu_custom_call.1} parent=31 // pred_check_branch
          %532 = sbr.rel (%p530) target = $region40
        $region39: #{tpu_custom_call.1} parent=31 // pred_region
          %s533 = smul.u32 2, %s20
          %s535 = ssub.s32 2048, 2048
          %536 = vsyncadd %s526, %s535
          %s537 = smul.addr %s533, 8
          %s538 = smul.addr %s537, 128
          %s539 = scalar_lea.hbm %s3, %s538
          %s540 = sshll.u32 %s529, 4
          %s541 = int_to_ptr.vmem [resolvable:$true] %s540
          %546 = dma.vmem_to_hbm [thread:$0]  %s541, 2048, %s539, %s526, 256, 256, 16
        $region40: #{tpu_custom_call.1} parent=31 // pred_fallthru
          _
      $region32: #{tpu_custom_call.1} parent=5 // pred_fallthru
        _
      %p547 = scmp.le.s32.totalorder 2, %s15
      // Predicated region
      $region41: #{tpu_custom_call.1} parent=5 // pred_check
        %p548 = pneg %p547
      $region42: #{tpu_custom_call.1} parent=5 // pred_check_branch
        %550 = sbr.rel (%p548) target = $region44
      $region43: #{tpu_custom_call.1} parent=5 // pred_region
        %s551 = ssub.s32 %s15, 2
        // Predicated region
        $region45: #{tpu_custom_call.1} parent=43 // pred_check
          %p552 = pneg %p112
        $region46: #{tpu_custom_call.1} parent=43 // pred_check_branch
          %554 = sbr.rel (%p552) target = $region48
        $region47: #{tpu_custom_call.1} parent=43 // pred_region
          %s555 = sand.u32 %s97, 1
          %s556 = scalar_lea.sflag [#allocation4], %s555
          %s557 = sand.u32 %s97, 1
          %s558 = smul.addr %s557, 128
          %s559 = scalar_lea.vmem [#allocation5], %s558
          %560 = dma.done %s556, 2048
        $region48: #{tpu_custom_call.1} parent=43 // pred_fallthru
          _
      $region44: #{tpu_custom_call.1} parent=5 // pred_fallthru
        _
    $region6: #{tpu_custom_call.1} parent=1 // loop_footer
      %s19 = sadd.s32 1, %s15
    $region7: #{tpu_custom_call.1} parent=1 // loop_footer_branch
      %14 = sbr.rel target = $region3
    $region8: #{tpu_custom_call.1} parent=1 // loop_exit
      _
    %561 = vsyncpa [#allocation3], 1
    %s562 = scalar_lea.sflag [#allocation3], 1
    %563 = vsyncpa %s562, 1
    %564 = vsyncpa [#allocation4], 1
    %s565 = scalar_lea.sflag [#allocation4], 1
    %566 = vsyncpa %s565, 1

</llo_original>
